<compile_context>
chip_gen: v7x
topology: tpu7x:2x2x1
jax: 0.10.0
libtpu: 0.0.40
codegen_flags: <defaults>
</compile_context>

<pallas_src>
import jax
import jax.numpy as jnp
from jax.experimental import pallas as pl
from jax.experimental.pallas import tpu as pltpu

_MIB = 1024 * 1024


def _round_up(v, m):
    return ((v + m - 1) // m) * m


def _pad_to(a, shape):
    pads = [(0, t - s) for s, t in zip(a.shape, shape)]
    if any(hi for _, hi in pads):
        a = jnp.pad(a, pads)
    return a


def _vmem_capacity_bytes():
    try:
        return int(pltpu.get_tpu_info().vmem_capacity_bytes)
    except Exception:
        return 64 * _MIB  # conservative fallback (v7x per-TC capacity)


def _sublane_align(*dtypes):
    # f32 -> 8, bf16 -> 16, int8/fp8 -> 32 (sub-32-bit dtypes pack sublanes).
    return max(8, max(32 // jnp.dtype(d).itemsize for d in dtypes))


def _pick_tile(padded, cap, fits, align=128):
    """Largest multiple-of-`align` divisor of `padded` that is <= cap and fits."""
    t = max(align, (min(cap, padded) // align) * align)
    while t > align:
        if padded % t == 0 and fits(t):
            return t
        t -= align
    return align


def _promote(a, b):
    if a.dtype != b.dtype:
        ct = jnp.promote_types(a.dtype, b.dtype)
        a, b = a.astype(ct), b.astype(ct)
    return a, b


# --------------------------------------------------------------------------
# Kernels
# --------------------------------------------------------------------------
def _reduce_small_kernel(st_ref, x_ref, o_ref):
    # st_ref: (Bt, K, N), x_ref: (Bt, N, F), o_ref: (Bt, K, F).
    # Whole per-batch contraction in one step; several graphs per step.
    a, b = _promote(st_ref[...], x_ref[...])
    o_ref[...] = jnp.einsum(
        "bkn,bnf->bkf", a, b, preferred_element_type=jnp.float32
    ).astype(o_ref.dtype)


def _reduce_tiled_acc_in_out_kernel(st_ref, x_ref, o_ref):
    # f32 output: accumulate directly into the resident output block
    # (no scratch, no finalize copy).
    @pl.when(pl.program_id(3) == 0)
    def _init():
        o_ref[...] = jnp.zeros_like(o_ref)

    a, b = _promote(st_ref[...], x_ref[...])
    o_ref[...] += jnp.dot(a, b, preferred_element_type=jnp.float32)


def _reduce_tiled_scratch_kernel(st_ref, x_ref, o_ref, acc_ref):
    # Non-f32 output: accumulate in an f32 scratch, cast on the last step.
    n = pl.program_id(3)

    @pl.when(n == 0)
    def _init():
        acc_ref[...] = jnp.zeros_like(acc_ref)

    a, b = _promote(st_ref[...], x_ref[...])
    acc_ref[...] += jnp.dot(a, b, preferred_element_type=jnp.float32)

    @pl.when(n == pl.num_programs(3) - 1)
    def _finalize():
        o_ref[...] = acc_ref[...].astype(o_ref.dtype)


# --------------------------------------------------------------------------
# Wrapper
# --------------------------------------------------------------------------
def base_reduce_forward(x, s, batch=None, *, max_tile=1024, vmem_budget_bytes=None):
    """Dense BaseReduce forward (reduce_op='sum'): returns (x_pool, batch_pool).

    x: [B, N, F], s: [B, N, K]  ->  x_pool: [B, K, F]
    """
    B, N, F = x.shape
    Bs, Ns, K = s.shape
    assert (B, N) == (Bs, Ns), "x and s must share batch and node dims"

    out_dtype = jnp.result_type(x.dtype, s.dtype)
    s_it = jnp.dtype(s.dtype).itemsize
    x_it = jnp.dtype(x.dtype).itemsize
    o_it = jnp.dtype(out_dtype).itemsize

    capacity = _vmem_capacity_bytes()
    budget = (vmem_budget_bytes if vmem_budget_bytes is not None
              else (capacity * 3) // 4)  # leave headroom for internal scratch

    # Only wrapper-added HBM pass: s -> [B, K, N] (MXU-natural orientation).
    # s is the small array (K << F); XLA fuses transpose (+ the K pad below)
    # into a single producer.  x is never cast or copied by the wrapper unless
    # the general path needs zero padding of N / F.
    s_t = jnp.swapaxes(s, -1, -2)

    flops = 2 * B * N * K * F
    per_batch = K * N * s_it + N * F * x_it + K * F * o_it

    if per_batch <= budget // 8:
        # ---------------- Small path ----------------
        # Full-dim blocks (no (8,128) padding); batch Bt graphs per grid step
        # to amortize per-step overhead and lengthen DMA bursts.  Bt is capped
        # to keep the in-kernel batched matmul from blowing up code size.
        target = max(2 * _MIB, min(8 * _MIB, budget // 6))
        Bt = int(max(1, min(B, 256, target // max(per_batch, 1))))
        n_steps = (B + Bt - 1) // Bt  # last block is masked, B never padded

        need = 2 * Bt * per_batch  # double-buffered inputs + output
        vmem_limit = int(min(max(need, 32 * _MIB), capacity))

        cost = pl.CostEstimate(flops=flops, transcendentals=0,
                               bytes_accessed=B * per_batch)

        x_pool = pl.pallas_call(
            _reduce_small_kernel,
            out_shape=jax.ShapeDtypeStruct((B, K, F), out_dtype),
            grid_spec=pltpu.PrefetchScalarGridSpec(
                num_scalar_prefetch=0,
                grid=(n_steps,),
                in_specs=[
                    pl.BlockSpec((Bt, K, N), lambda b: (b, 0, 0)),
                    pl.BlockSpec((Bt, N, F), lambda b: (b, 0, 0)),
                ],
                out_specs=pl.BlockSpec((Bt, K, F), lambda b: (b, 0, 0)),
            ),
            compiler_params=pltpu.CompilerParams(
                dimension_semantics=("parallel",),
                vmem_limit_bytes=vmem_limit,
            ),
            cost_estimate=cost,
        )(s_t, x)
        return x_pool, batch

    # ---------------- General path ----------------
    K_align = _sublane_align(s.dtype, out_dtype)
    K_pad = _round_up(K, K_align)
    N_pad = _round_up(N, 128)

    acc_in_out = out_dtype == jnp.float32
    acc_it = 0 if acc_in_out else 4

    def need(nt, ft):
        return (2 * nt * (K_pad * s_it + ft * x_it)   # double-buffered inputs
                + 2 * K_pad * ft * o_it               # double-buffered output
                + K_pad * ft * acc_it)                # f32 scratch (non-f32 out)

    # Prefer F_tile = F (full-dim exemption: no padded copy of x, no f-tile
    # re-reads of s_t); fall back to 128-aligned F tiling only if it can't fit.
    if need(128, F) <= budget:
        F_tile, F_pad = F, F
    else:
        F_pad = _round_up(F, 128)
        F_tile = _pick_tile(F_pad, max_tile, lambda ft: need(128, ft) <= budget)
    N_tile = _pick_tile(N_pad, max_tile, lambda nt: need(nt, F_tile) <= budget)

    n_tiles = N_pad // N_tile
    f_tiles = F_pad // F_tile

    # v7x has 2 TensorCores; only 'parallel' axes shard across them.  When
    # B == 1 and there is a single F tile, split the N reduction into two
    # partial sums (added in the wrapper) so both cores get work.
    split_n = 2 if (acc_in_out and B * f_tiles == 1
                    and n_tiles >= 2 and n_tiles % 2 == 0) else 1
    n_per_split = n_tiles // split_n

    # Zero padding (materializes a copy only when a dim actually changes; for
    # N % 128 == 0 and F_tile == F nothing is copied).
    # TODO(synk): the N tail could be masked in-kernel instead of zero-padded.
    s_t_p = _pad_to(s_t, (B, K_pad, N_pad))
    x_p = _pad_to(x, (B, N_pad, F_pad))

    vmem_limit = int(min(max(need(N_tile, F_tile), 32 * _MIB), capacity))

    cost = pl.CostEstimate(
        flops=flops, transcendentals=0,
        bytes_accessed=B * (K_pad * N_pad * s_it * f_tiles
                            + N_pad * F_pad * x_it
                            + K_pad * F_pad * o_it * split_n))

    kernel = (_reduce_tiled_acc_in_out_kernel if acc_in_out
              else _reduce_tiled_scratch_kernel)
    scratch = [] if acc_in_out else [pltpu.VMEM((K_pad, F_tile), jnp.float32)]

    out = pl.pallas_call(
        kernel,
        out_shape=jax.ShapeDtypeStruct((split_n, B, K_pad, F_pad), out_dtype),
        grid_spec=pltpu.PrefetchScalarGridSpec(
            num_scalar_prefetch=0,
            grid=(split_n, B, f_tiles, n_per_split),
            in_specs=[
                pl.BlockSpec((None, K_pad, N_tile),
                             lambda c, b, f, n: (b, 0, c * n_per_split + n)),
                pl.BlockSpec((None, N_tile, F_tile),
                             lambda c, b, f, n: (b, c * n_per_split + n, f)),
            ],
            out_specs=pl.BlockSpec((None, None, K_pad, F_tile),
                                   lambda c, b, f, n: (c, b, 0, f)),
            scratch_shapes=scratch,
        ),
        compiler_params=pltpu.CompilerParams(
            dimension_semantics=("parallel", "parallel", "parallel", "arbitrary"),
            vmem_limit_bytes=vmem_limit,
        ),
        cost_estimate=cost,
    )(s_t_p, x_p)

    x_pool = out[0] + out[1] if split_n == 2 else out[0]
    x_pool = x_pool[:, :K, :F]

    # Dense pooler: reduce_batch returns None when batch is None; the sparse
    # scatter-based batch reduction is not applicable to the dense path.
    return x_pool, batch


if __name__ == "__main__":
    key = jax.random.PRNGKey(0)
    k1, k2, k3, k4, k5, k6 = jax.random.split(key, 6)

    # --- Small path: full-dim blocks, several graphs per grid step ---
    B, N, F, K = 2, 16, 32, 8
    x = jax.random.normal(k1, (B, N, F), dtype=jnp.float32)
    s = jax.nn.softmax(jax.random.normal(k2, (B, N, K), dtype=jnp.float32), axis=-1)
    x_pool, batch_pool = base_reduce_forward(x, s)
    x_pool = jax.block_until_ready(x_pool)
    ref = jnp.einsum("bnk,bnf->bkf", s, x)
    assert x_pool.shape == (B, K, F)
    assert batch_pool is None
    assert jnp.allclose(x_pool, ref, atol=1e-5, rtol=1e-5)

    # --- General path: F_tile = F, N reduction with accumulation in the
    #     output block, split into two partial sums (dual-TC layout on v7x).
    #     The small VMEM-budget override forces the tiled path at test shapes.
    B2, N2, F2, K2 = 1, 512, 256, 12
    x2 = jax.random.normal(k3, (B2, N2, F2), dtype=jnp.float32)
    s2 = jax.nn.softmax(jax.random.normal(k4, (B2, N2, K2), dtype=jnp.float32), axis=-1)
    x_pool2, _ = base_reduce_forward(x2, s2, vmem_budget_bytes=1 * _MIB)
    x_pool2 = jax.block_until_ready(x_pool2)
    ref2 = jnp.einsum("bnk,bnf->bkf", s2, x2)
    assert x_pool2.shape == (B2, K2, F2)
    assert jnp.allclose(x_pool2, ref2, atol=2e-3, rtol=2e-3)

    # --- Mixed dtype (bf16 features, f32 select): promotion happens in VMEM ---
    B3, N3, F3, K3 = 2, 64, 128, 16
    x3 = jax.random.normal(k5, (B3, N3, F3), dtype=jnp.bfloat16)
    s3 = jax.nn.softmax(jax.random.normal(k6, (B3, N3, K3), dtype=jnp.float32), axis=-1)
    x_pool3, _ = base_reduce_forward(x3, s3)
    x_pool3 = jax.block_until_ready(x_pool3)
    ref3 = jnp.einsum("bnk,bnf->bkf", s3, x3.astype(jnp.float32))
    assert x_pool3.shape == (B3, K3, F3)
    assert x_pool3.dtype == jnp.float32
    assert jnp.allclose(x_pool3, ref3, atol=1e-2, rtol=1e-2)

    print("KERNEL_OK")
</pallas_src>

<mosaic_0001>
module attributes {stable_mosaic.version = 11 : i64} {
  func.func @_reduce_small_kernel(%arg0: i32, %arg1: memref<2x8x16xf32, #tpu.memory_space<vmem>>, %arg2: memref<2x16x32xf32, #tpu.memory_space<vmem>>, %arg3: memref<2x8x32xf32, #tpu.memory_space<vmem>>) attributes {dimension_semantics = [#tpu.dimension_semantics<parallel>], iteration_bounds = array<i64: 1>, scalar_prefetch = 0 : i64, scratch_operands = 0 : i64, tpu.core_type = #tpu.core_type<tc>, window_params = [{transform_indices = @transform_0, window_bounds = array<i64: 2, 8, 16>}, {transform_indices = @transform_1, window_bounds = array<i64: 2, 16, 32>}, {transform_indices = @transform_2, window_bounds = array<i64: 2, 8, 32>}]} {
    %c0 = arith.constant 0 : index
    %c0_0 = arith.constant 0 : index
    %c0_1 = arith.constant 0 : index
    %0 = vector.load %arg1[%c0, %c0_0, %c0_1] : memref<2x8x16xf32, #tpu.memory_space<vmem>>, vector<2x8x16xf32>
    %c0_2 = arith.constant 0 : index
    %c0_3 = arith.constant 0 : index
    %c0_4 = arith.constant 0 : index
    %1 = vector.load %arg2[%c0_2, %c0_3, %c0_4] : memref<2x16x32xf32, #tpu.memory_space<vmem>>, vector<2x16x32xf32>
    "tpu.trace_start"() <{level = 10 : i32, message = "bkn,bnf->bkf"}> : () -> ()
    %cst = arith.constant dense<0.000000e+00> : vector<2x8x32xf32>
    %2 = tpu.matmul %0, %1, %cst {dimension_numbers = #tpu.dot_dimension_numbers<[2], [1], [1], [2], [0, 0, 0, 1, 1, 2], [0], [0]>} : vector<2x8x16xf32>, vector<2x16x32xf32>, vector<2x8x32xf32> -> vector<2x8x32xf32>
    "tpu.trace_stop"() : () -> ()
    %c0_5 = arith.constant 0 : index
    %c0_6 = arith.constant 0 : index
    %c0_7 = arith.constant 0 : index
    %3 = vector.load %arg3[%c0_5, %c0_6, %c0_7] : memref<2x8x32xf32, #tpu.memory_space<vmem>>, vector<2x8x32xf32>
    tpu.vector_store %arg3[%c0_5, %c0_6, %c0_7], %2 {strides = array<i32>} : memref<2x8x32xf32, #tpu.memory_space<vmem>>, vector<2x8x32xf32>,
    return
  }
  func.func @transform_0(%arg0: i32) -> (i32, i32, i32) {
    %c0_i32 = arith.constant 0 : i32
    %c0_i32_0 = arith.constant 0 : i32
    %c0_i32_1 = arith.constant 0 : i32
    return %arg0, %c0_i32, %c0_i32_0 : i32, i32, i32
  }
  func.func @transform_1(%arg0: i32) -> (i32, i32, i32) {
    %c0_i32 = arith.constant 0 : i32
    %c0_i32_0 = arith.constant 0 : i32
    %c0_i32_1 = arith.constant 0 : i32
    return %arg0, %c0_i32, %c0_i32_0 : i32, i32, i32
  }
  func.func @transform_2(%arg0: i32) -> (i32, i32, i32) {
    %c0_i32 = arith.constant 0 : i32
    %c0_i32_0 = arith.constant 0 : i32
    %c0_i32_1 = arith.constant 0 : i32
    return %arg0, %c0_i32, %c0_i32_0 : i32, i32, i32
  }
}

</mosaic_0001>

<llo_original>
// kernel: tpu_custom_call.1
$region0: #{tpu_custom_call.1}
  #allocation0 [shape = 'u32[]', space=smem, size = 0x4, offset = 0x4, fixed_abs, tag = 'smem constant byte address 0x4 - core index']
  #allocation1 [shape = 'u32[144,128]{1,0:T(1,128)}', space=vmem, size = 0x12000, scoped, tag = 'internal scratch']
  %s0 = inlined_call_operand.hbm [shape: f32[2,8,16], index: 0, kind: input, shape index: {}]
  %s1 = inlined_call_operand.hbm [shape: f32[2,16,32], index: 1, kind: input, shape index: {}]
  %s2 = inlined_call_operand.hbm [shape: f32[2,8,32], index: 2, kind: output, shape index: {}]
  %s3 = sld [smem:[#allocation0]]
  $region26: #{tpu_custom_call.1} parent=0
    _
  %s5 = ssub.s32 1, %s3
  %s6 = scalar_select 0, %s5, %s3
  $region1: #{tpu_custom_call.1} parent=0
    #allocation2 [shape = 'u8[8192]{0}', space=vmem, size = 0x2000, scoped, tag = 'input window, operand 0, single buffered']
    #allocation3 [shape = 's32[1]{0}', space=sflag, size = 0x4, scoped, tag = 'scoped memory for tpu_custom_call.1']
    #allocation4 [shape = 's32[1]{0}', space=sflag, size = 0x4, scoped, tag = 'scoped memory for tpu_custom_call.1']
    #allocation5 [shape = 'u8[16384]{0}', space=vmem, size = 0x4000, scoped, tag = 'input window, operand 1, single buffered']
    #allocation6 [shape = 's32[1]{0}', space=sflag, size = 0x4, scoped, tag = 'scoped memory for tpu_custom_call.1']
    #allocation7 [shape = 'u8[8192]{0}', space=vmem, size = 0x2000, scoped, tag = 'output window, operand 0, single buffered']
    %7 = vsyncpa [#allocation3], 0
    %8 = vsyncpa [#allocation6], 0
    %9 = vsyncpa [#allocation4], 0
    // Predicated region
    $region2: #{tpu_custom_call.1} parent=1 // pred_check
      _
    $region3: #{tpu_custom_call.1} parent=1 // pred_check_branch
      %11 = sbr.rel (0) target = $region5
    $region4: #{tpu_custom_call.1} parent=1 // pred_region
      %s13 = ssub.s32 256, 256
      %14 = vsyncadd [#allocation3], %s13
      %s15 = sshll.u32 [#allocation2], 4
      %s16 = int_to_ptr.vmem [resolvable:$true] %s15
      %21 = dma.hbm_to_vmem [thread:$0]  %s0, 256, %s16, [#allocation3], 128, 128, 8
    $region5: #{tpu_custom_call.1} parent=1 // pred_fallthru
      _
    // Predicated region
    $region6: #{tpu_custom_call.1} parent=1 // pred_check
      _
    $region7: #{tpu_custom_call.1} parent=1 // pred_check_branch
      %23 = sbr.rel (0) target = $region9
    $region8: #{tpu_custom_call.1} parent=1 // pred_region
      %s25 = ssub.s32 512, 512
      %26 = vsyncadd [#allocation6], %s25
      %s27 = sshll.u32 [#allocation5], 4
      %s28 = int_to_ptr.vmem [resolvable:$true] %s27
      %33 = dma.hbm_to_vmem [thread:$0]  %s1, 512, %s28, [#allocation6], 128, 128, 8
    $region9: #{tpu_custom_call.1} parent=1 // pred_fallthru
      _
    // Predicated region
    $region10: #{tpu_custom_call.1} parent=1 // pred_check
      _
    $region11: #{tpu_custom_call.1} parent=1 // pred_check_branch
      %35 = sbr.rel (0) target = $region13
    $region12: #{tpu_custom_call.1} parent=1 // pred_region
      %36 = dma.done [#allocation3], 256
    $region13: #{tpu_custom_call.1} parent=1 // pred_fallthru
      _
    // Predicated region
    $region14: #{tpu_custom_call.1} parent=1 // pred_check
      _
    $region15: #{tpu_custom_call.1} parent=1 // pred_check_branch
      %38 = sbr.rel (0) target = $region17
    $region16: #{tpu_custom_call.1} parent=1 // pred_region
      %39 = dma.done [#allocation6], 512
    $region17: #{tpu_custom_call.1} parent=1 // pred_fallthru
      _
    %v40 = vld [vmem:[#allocation2] sm:$0xff]
    %v41 = vld [vmem:[#allocation2 + $0x8] sm:$0xff]
    %v42 = vld [vmem:[#allocation5] sm:$0xff]
    %v43 = vld [vmem:[#allocation5 + $0x8] sm:$0xff]
    %v44 = vld [vmem:[#allocation5 + $0x10] sm:$0xff]
    %v45 = vld [vmem:[#allocation5 + $0x18] sm:$0xff]
    %vm46 = vcmask 130048
    %v48 = vsel %vm46, %v40, 0
    %50 = vmatprep.subr.mxu0 0.0
    %51 = vmatpush1.msra.mxu0 %v42
    %52 = vmatprep.subr.mxu0 0.0
    %53 = vmatpush1.msra.mxu0 %v43
    %54 = vmatprep.subr.mxu0 0.0
    %55 = vmatpush1.msra.mxu0 0.0
    %56 = vmatprep.subr.mxu0 0.0
    %57 = vmatpush1.msra.mxu0 0.0
    %58 = vmatprep.subr.mxu0 0.0
    %59 = vmatpush1.msra.mxu0 0.0
    %60 = vmatprep.subr.mxu0 0.0
    %61 = vmatpush1.msra.mxu0 0.0
    %62 = vmatprep.subr.mxu0 0.0
    %63 = vmatpush1.msra.mxu0 0.0
    %64 = vmatprep.subr.mxu0 0.0
    %65 = vmatpush1.msra.mxu0 0.0
    %66 = vmatprep.subr.mxu0 0.0
    %67 = vmatpush1.msra.mxu0 0.0
    %68 = vmatprep.subr.mxu0 0.0
    %69 = vmatpush1.msra.mxu0 0.0
    %70 = vmatprep.subr.mxu0 0.0
    %71 = vmatpush1.msra.mxu0 0.0
    %72 = vmatprep.subr.mxu0 0.0
    %73 = vmatpush1.msra.mxu0 0.0
    %74 = vmatprep.subr.mxu0 0.0
    %75 = vmatpush1.msra.mxu0 0.0
    %76 = vmatprep.subr.mxu0 0.0
    %77 = vmatpush1.msra.mxu0 0.0
    %78 = vmatprep.subr.mxu0 0.0
    %79 = vmatpush1.msra.mxu0 0.0
    %80 = vmatprep.subr.mxu0 0.0
    %81 = vmatpush1.msra.mxu0 0.0
    %82 = vmatprep.subr.mxu0 0.0
    %83 = vmatpush1.msra.mxu0 0.0
    %84 = vmatprep.subr.mxu0 0.0
    %85 = vmatpush1.msra.mxu0 0.0
    %86 = vmatprep.subr.mxu0 0.0
    %87 = vmatpush1.msra.mxu0 0.0
    %88 = vmatprep.subr.mxu0 0.0
    %89 = vmatpush1.msra.mxu0 0.0
    %90 = vmatprep.subr.mxu0 0.0
    %91 = vmatpush1.msra.mxu0 0.0
    %92 = vmatprep.subr.mxu0 0.0
    %93 = vmatpush1.msra.mxu0 0.0
    %94 = vmatprep.subr.mxu0 0.0
    %95 = vmatpush1.msra.mxu0 0.0
    %96 = vmatprep.subr.mxu0 0.0
    %97 = vmatpush1.msra.mxu0 0.0
    %98 = vmatprep.subr.mxu0 0.0
    %99 = vmatpush1.msra.mxu0 0.0
    %100 = vmatprep.subr.mxu0 0.0
    %101 = vmatpush1.msra.mxu0 0.0
    %102 = vmatprep.subr.mxu0 0.0
    %103 = vmatpush1.msra.mxu0 0.0
    %104 = vmatprep.subr.mxu0 0.0
    %105 = vmatpush1.msra.mxu0 0.0
    %106 = vmatprep.subr.mxu0 0.0
    %107 = vmatpush1.msra.mxu0 0.0
    %108 = vmatprep.subr.mxu0 0.0
    %109 = vmatpush1.msra.mxu0 0.0
    %110 = vmatprep.subr.mxu0 0.0
    %111 = vmatpush1.msra.mxu0 0.0
    %112 = vmatprep.subr.mxu0 0.0
    %113 = vmatpush1.msra.mxu0 0.0
    %114 = vmatprep.mubr.f32.mxu0 0.0
    %115 = vmatmul.mubr.f32.gmra.mrb[0].mxu0 %v48
    %v116 = vpop.f32.mrb[0].mxu0
    %v117 = vadd.f32 0.0, %v116
    %v118 = vpop.f32.mrb[0].mxu0
    %119 = vdwg.mxu0
    %v121 = vsel %vm46, %v41, 0
    %123 = vmatprep.subr.mxu0 0.0
    %124 = vmatpush1.msra.mxu0 %v44
    %125 = vmatprep.subr.mxu0 0.0
    %126 = vmatpush1.msra.mxu0 %v45
    %127 = vmatprep.subr.mxu0 0.0
    %128 = vmatpush1.msra.mxu0 0.0
    %129 = vmatprep.subr.mxu0 0.0
    %130 = vmatpush1.msra.mxu0 0.0
    %131 = vmatprep.subr.mxu0 0.0
    %132 = vmatpush1.msra.mxu0 0.0
    %133 = vmatprep.subr.mxu0 0.0
    %134 = vmatpush1.msra.mxu0 0.0
    %135 = vmatprep.subr.mxu0 0.0
    %136 = vmatpush1.msra.mxu0 0.0
    %137 = vmatprep.subr.mxu0 0.0
    %138 = vmatpush1.msra.mxu0 0.0
    %139 = vmatprep.subr.mxu0 0.0
    %140 = vmatpush1.msra.mxu0 0.0
    %141 = vmatprep.subr.mxu0 0.0
    %142 = vmatpush1.msra.mxu0 0.0
    %143 = vmatprep.subr.mxu0 0.0
    %144 = vmatpush1.msra.mxu0 0.0
    %145 = vmatprep.subr.mxu0 0.0
    %146 = vmatpush1.msra.mxu0 0.0
    %147 = vmatprep.subr.mxu0 0.0
    %148 = vmatpush1.msra.mxu0 0.0
    %149 = vmatprep.subr.mxu0 0.0
    %150 = vmatpush1.msra.mxu0 0.0
    %151 = vmatprep.subr.mxu0 0.0
    %152 = vmatpush1.msra.mxu0 0.0
    %153 = vmatprep.subr.mxu0 0.0
    %154 = vmatpush1.msra.mxu0 0.0
    %155 = vmatprep.subr.mxu0 0.0
    %156 = vmatpush1.msra.mxu0 0.0
    %157 = vmatprep.subr.mxu0 0.0
    %158 = vmatpush1.msra.mxu0 0.0
    %159 = vmatprep.subr.mxu0 0.0
    %160 = vmatpush1.msra.mxu0 0.0
    %161 = vmatprep.subr.mxu0 0.0
    %162 = vmatpush1.msra.mxu0 0.0
    %163 = vmatprep.subr.mxu0 0.0
    %164 = vmatpush1.msra.mxu0 0.0
    %165 = vmatprep.subr.mxu0 0.0
    %166 = vmatpush1.msra.mxu0 0.0
    %167 = vmatprep.subr.mxu0 0.0
    %168 = vmatpush1.msra.mxu0 0.0
    %169 = vmatprep.subr.mxu0 0.0
    %170 = vmatpush1.msra.mxu0 0.0
    %171 = vmatprep.subr.mxu0 0.0
    %172 = vmatpush1.msra.mxu0 0.0
    %173 = vmatprep.subr.mxu0 0.0
    %174 = vmatpush1.msra.mxu0 0.0
    %175 = vmatprep.subr.mxu0 0.0
    %176 = vmatpush1.msra.mxu0 0.0
    %177 = vmatprep.subr.mxu0 0.0
    %178 = vmatpush1.msra.mxu0 0.0
    %179 = vmatprep.subr.mxu0 0.0
    %180 = vmatpush1.msra.mxu0 0.0
    %181 = vmatprep.subr.mxu0 0.0
    %182 = vmatpush1.msra.mxu0 0.0
    %183 = vmatprep.subr.mxu0 0.0
    %184 = vmatpush1.msra.mxu0 0.0
    %185 = vmatprep.subr.mxu0 0.0
    %186 = vmatpush1.msra.mxu0 0.0
    %187 = vmatprep.mubr.f32.mxu0 0.0
    %188 = vmatmul.mubr.f32.gmra.mrb[0].mxu0 %v121
    %v189 = vpop.f32.mrb[0].mxu0
    %v190 = vadd.f32 0.0, %v189
    %v191 = vpop.f32.mrb[0].mxu0
    %192 = vdwg.mxu0
    %vm193 = vcmask 261120
    %194 = vst.msk [vmem:[#allocation7] sm:$0xff] %vm193, %v117
    %195 = vst.msk [vmem:[#allocation7 + $0x8] sm:$0xff] %vm193, %v190
    // Predicated region
    $region18: #{tpu_custom_call.1} parent=1 // pred_check
      _
    $region19: #{tpu_custom_call.1} parent=1 // pred_check_branch
      %197 = sbr.rel (0) target = $region21
    $region20: #{tpu_custom_call.1} parent=1 // pred_region
      %s199 = ssub.s32 256, 256
      %200 = vsyncadd [#allocation4], %s199
      %s201 = sshll.u32 [#allocation7], 4
      %s202 = int_to_ptr.vmem [resolvable:$true] %s201
      %207 = dma.vmem_to_hbm [thread:$0]  %s202, 256, %s2, [#allocation4], 128, 128, 8
    $region21: #{tpu_custom_call.1} parent=1 // pred_fallthru
      _
    // Predicated region
    $region22: #{tpu_custom_call.1} parent=1 // pred_check
      _
    $region23: #{tpu_custom_call.1} parent=1 // pred_check_branch
      %209 = sbr.rel (0) target = $region25
    $region24: #{tpu_custom_call.1} parent=1 // pred_region
      %210 = dma.done [#allocation4], 256
    $region25: #{tpu_custom_call.1} parent=1 // pred_fallthru
      _
    %211 = vsyncpa [#allocation3], 1
    %212 = vsyncpa [#allocation6], 1
    %213 = vsyncpa [#allocation4], 1

</llo_original>
